<compile_context>
chip_gen: v6e
topology: v6e:2x2x1
jax: 0.10.0
libtpu: 0.0.40
codegen_flags: <defaults>
</compile_context>

<pallas_src>
import functools

import jax
import jax.numpy as jnp
from jax.experimental import pallas as pl
from jax.experimental.pallas import tpu as pltpu


_VMEM_TILE_BUDGET = 20 * 1024 * 1024   # double-buffered tile plan ceiling
_VMEM_LIMIT_BYTES = 32 * 1024 * 1024   # explicit scoped-VMEM limit (safe on v5e/v6e/v7x)
_TK_CAP = 2048                         # full-D single-K path up to this embedding dim


def _round_up(x, m):
    return (x + m - 1) // m * m


def _cdiv(a, b):
    return (a + b - 1) // b


# ---------------------------------------------------------------------------
# Kernels
# ---------------------------------------------------------------------------

def _gauss_linear_kernel_singlek(x_ref, mt_ref, o_ref):
    """Whole embedding dim in one tile: direct write, bias from resident tile."""
    mt = mt_ref[...]                                            # (Dp, tn)
    acc = jnp.dot(x_ref[...], mt, preferred_element_type=jnp.float32)
    mtf = mt.astype(jnp.float32)
    bias = -0.5 * jnp.sum(mtf * mtf, axis=0, keepdims=True)     # (1, tn), f32
    o_ref[...] = (acc + bias).astype(o_ref.dtype)


def _gauss_linear_kernel_multik(x_ref, mt_ref, o_ref, acc_ref, bias_ref):
    """Reduce over embedding dim (grid axis 2); bias accumulated per k, f32."""
    k = pl.program_id(2)
    mt = mt_ref[...]                                            # (tk, tn)
    part = jnp.dot(x_ref[...], mt, preferred_element_type=jnp.float32)
    mtf = mt.astype(jnp.float32)
    bpart = -0.5 * jnp.sum(mtf * mtf, axis=0, keepdims=True)    # (1, tn)

    @pl.when(k == 0)
    def _():
        acc_ref[...] = part          # overwrite: skip zero-init round trip
        bias_ref[...] = bpart

    @pl.when(k > 0)
    def _():
        acc_ref[...] += part
        bias_ref[...] += bpart

    @pl.when(k == pl.num_programs(2) - 1)
    def _():
        o_ref[...] = (acc_ref[...] + bias_ref[...]).astype(o_ref.dtype)


# ---------------------------------------------------------------------------
# Weight preparation (one-time per weight; hoisted out of the per-call path)
# ---------------------------------------------------------------------------

def prepare_means(means, *, dtype=None):
    """Pad classes to a multiple of 128, (optionally) cast, and transpose to (Dp, Cp).

    Call once per weight; reuse the result across forward calls.  Padded
    classes are zero -> zero bias and zero logits, sliced off by the caller.
    `dtype=jnp.bfloat16` halves the dominant HBM traffic (f32 accumulation is
    kept inside the kernel).
    """
    C, D = means.shape
    Cp = _round_up(C, 128)
    Dp = D if D <= _TK_CAP else _round_up(D, 512)
    if dtype is not None:
        means = means.astype(dtype)
    if Cp != C or Dp != D:
        means = jnp.pad(means, ((0, Cp - C), (0, Dp - D)))
    return jnp.transpose(means)                                 # (Dp, Cp)


# ---------------------------------------------------------------------------
# Tile heuristics
# ---------------------------------------------------------------------------

def _pick_tm(N):
    # 256 halves the weight-push cadence on v6e/v7x for large batches; the
    # 128x128 MXU on v5e prefers 128 (pass tm=128 explicitly there).
    cap = 256 if N >= 256 else 128
    return min(_round_up(N, 8), cap)


def _pick_tn(Cp, n_row_tiles):
    tn = 128
    for cand in (512, 256, 128):
        if Cp % cand == 0:
            tn = cand
            break
    # v7x has 2 TensorCores: make sure at least one parallel axis has >=2 steps.
    if n_row_tiles == 1 and Cp // tn < 2:
        for cand in (256, 128):
            if Cp % cand == 0 and Cp // cand >= 2:
                tn = cand
                break
    return tn


def _footprint(tm, tn, tk, itemsize, multik):
    f = 2 * (tm + tn) * tk * itemsize   # double-buffered x and means tiles
    f += 2 * tm * tn * itemsize         # double-buffered output tile
    if multik:
        f += (tm * tn + tn) * 4         # f32 accumulator + bias scratch
    return f


def _pick_tk(Dp, tm, tn, itemsize):
    if _footprint(tm, tn, Dp, itemsize, False) <= _VMEM_TILE_BUDGET:
        return Dp                       # single-K: full contiguous D slab
    for cand in (2048, 1024, 512):
        if Dp % cand == 0 and _footprint(tm, tn, cand, itemsize, True) <= _VMEM_TILE_BUDGET:
            return cand
    return Dp if Dp % 512 != 0 else 512  # correctness fallback


# ---------------------------------------------------------------------------
# Forward
# ---------------------------------------------------------------------------

def gauss_linear_prepared(x, means_t, num_classes, *, tm=None, tn=None, tk=None):
    """out[n, c] = sum_d x[n,d]*means[c,d] - 0.5*sum_d means[c,d]^2.

    `means_t` is the (Dp, Cp) output of `prepare_means` (prepared once per
    weight); `num_classes` is the original (unpadded) class count.
    """
    N, D = x.shape
    Dp, Cp = means_t.shape
    C = num_classes
    itemsize = max(jnp.dtype(x.dtype).itemsize, jnp.dtype(means_t.dtype).itemsize)

    if tm is None:
        tm = _pick_tm(N)
    Np = _round_up(N, tm)
    if tn is None:
        tn = _pick_tn(Cp, Np // tm)
    if tk is None:
        tk = _pick_tk(Dp, tm, tn, itemsize)

    # Per-call x padding (x is the small streamed operand; means is pre-padded).
    if Np != N or Dp != D:
        x = jnp.pad(x, ((0, Np - N), (0, Dp - D)))

    nk = Dp // tk
    compiler_params = pltpu.CompilerParams(
        dimension_semantics=("parallel", "parallel") + (("arbitrary",) if nk > 1 else ()),
        vmem_limit_bytes=_VMEM_LIMIT_BYTES,
    )
    out_shape = jax.ShapeDtypeStruct((Np, Cp), x.dtype)

    if nk == 1:
        grid_spec = pltpu.PrefetchScalarGridSpec(
            num_scalar_prefetch=0,
            grid=(Np // tm, Cp // tn),
            in_specs=[
                pl.BlockSpec((tm, Dp), lambda i, j: (i, 0)),   # x tile
                pl.BlockSpec((Dp, tn), lambda i, j: (0, j)),   # means^T tile
            ],
            out_specs=pl.BlockSpec((tm, tn), lambda i, j: (i, j)),
            scratch_shapes=[],
        )
        kernel = _gauss_linear_kernel_singlek
    else:
        grid_spec = pltpu.PrefetchScalarGridSpec(
            num_scalar_prefetch=0,
            grid=(Np // tm, Cp // tn, nk),
            in_specs=[
                pl.BlockSpec((tm, tk), lambda i, j, k: (i, k)),
                pl.BlockSpec((tk, tn), lambda i, j, k: (k, j)),
            ],
            out_specs=pl.BlockSpec((tm, tn), lambda i, j, k: (i, j)),
            scratch_shapes=[
                pltpu.VMEM((tm, tn), jnp.float32),   # logit accumulator
                pltpu.VMEM((1, tn), jnp.float32),    # bias accumulator (f32)
            ],
        )
        kernel = _gauss_linear_kernel_multik

    out = pl.pallas_call(
        kernel,
        out_shape=out_shape,
        grid_spec=grid_spec,
        compiler_params=compiler_params,
    )(x, means_t)

    if Np != N or Cp != C:
        out = out[:N, :C]
    return out


def gauss_linear(x, means, **kwargs):
    """Convenience one-shot API (prepares the weight on every call)."""
    return gauss_linear_prepared(x, prepare_means(means), means.shape[0], **kwargs)


# ---------------------------------------------------------------------------
# Demo / self-test
# ---------------------------------------------------------------------------

if __name__ == "__main__":
    # Small, shape-consistent synthetic problem:
    #   embedding_dim = 64, num_classes = 256, batch = 16
    # GaussLinear.__init__ zeros `means`; use a deterministic xavier-normal
    # style init so the forward pass is non-trivial.
    embedding_dim = 64
    num_classes = 256
    batch = 16

    key = jax.random.PRNGKey(0)
    kx, km = jax.random.split(key)

    x = jax.random.normal(kx, (batch, embedding_dim), dtype=jnp.float32)
    xavier_std = (2.0 / (num_classes + embedding_dim)) ** 0.5
    means = xavier_std * jax.random.normal(
        km, (num_classes, embedding_dim), dtype=jnp.float32
    )

    # One-time weight preparation hoisted out of the per-call path.
    means_t = prepare_means(means)
    out = jax.block_until_ready(gauss_linear_prepared(x, means_t, num_classes))

    # Pure-JAX reference of the PyTorch forward.
    bias_ref = -0.5 * jnp.sum(means ** 2, axis=1)
    ref = x @ means.T + bias_ref[None, :]

    assert out.shape == (batch, num_classes)
    assert jnp.allclose(out, ref, atol=1e-4, rtol=1e-4), (
        float(jnp.max(jnp.abs(out - ref)))
    )

    # Ragged shapes (exercise padding / slicing paths and the one-shot API).
    x2 = jax.random.normal(jax.random.PRNGKey(1), (10, 40), dtype=jnp.float32)
    m2 = 0.1 * jax.random.normal(jax.random.PRNGKey(2), (200, 40), dtype=jnp.float32)
    out2 = jax.block_until_ready(gauss_linear(x2, m2))
    ref2 = x2 @ m2.T + (-0.5 * jnp.sum(m2 ** 2, axis=1))[None, :]
    assert out2.shape == (10, 200)
    assert jnp.allclose(out2, ref2, atol=1e-4, rtol=1e-4), (
        float(jnp.max(jnp.abs(out2 - ref2)))
    )

    # TODO(synk): update_params/update_counts/mean_loss are host-side, stateful
    # numpy stat updates, not part of forward(); not translated.
    print("KERNEL_OK")
</pallas_src>

<mosaic_0001>
module attributes {stable_mosaic.version = 11 : i64} {
  func.func @_gauss_linear_kernel_singlek(%arg0: i32, %arg1: i32, %arg2: memref<16x64xf32, #tpu.memory_space<vmem>>, %arg3: memref<64x128xf32, #tpu.memory_space<vmem>>, %arg4: memref<16x128xf32, #tpu.memory_space<vmem>>) attributes {dimension_semantics = [#tpu.dimension_semantics<parallel>, #tpu.dimension_semantics<parallel>], iteration_bounds = array<i64: 1, 2>, scalar_prefetch = 0 : i64, scratch_operands = 0 : i64, tpu.core_type = #tpu.core_type<tc>, window_params = [{transform_indices = @transform_0, window_bounds = array<i64: 16, 64>}, {transform_indices = @transform_1, window_bounds = array<i64: 64, 128>}, {transform_indices = @transform_2, window_bounds = array<i64: 16, 128>}]} {
    %c0 = arith.constant 0 : index
    %c0_0 = arith.constant 0 : index
    %0 = vector.load %arg3[%c0, %c0_0] : memref<64x128xf32, #tpu.memory_space<vmem>>, vector<64x128xf32>
    %c0_1 = arith.constant 0 : index
    %c0_2 = arith.constant 0 : index
    %1 = vector.load %arg2[%c0_1, %c0_2] : memref<16x64xf32, #tpu.memory_space<vmem>>, vector<16x64xf32>
    %cst = arith.constant dense<0.000000e+00> : vector<16x128xf32>
    %2 = tpu.matmul %1, %0, %cst {dimension_numbers = #tpu.dot_dimension_numbers<[1], [0], [0], [1], [0, 0, 1, 1], [], []>} : vector<16x64xf32>, vector<64x128xf32>, vector<16x128xf32> -> vector<16x128xf32>
    %3 = arith.mulf %0, %0 : vector<64x128xf32>
    %cst_3 = arith.constant dense<0.000000e+00> : vector<128xf32>
    %4 = vector.multi_reduction <add>, %3, %cst_3 [0] : vector<64x128xf32> to vector<128xf32>
    %5 = vector.shape_cast %4 : vector<128xf32> to vector<1x128xf32>
    %cst_4 = arith.constant -5.000000e-01 : f32
    %6 = vector.broadcast %cst_4 : f32 to vector<1x128xf32>
    %7 = arith.mulf %6, %5 : vector<1x128xf32>
    %8 = vector.broadcast %7 : vector<1x128xf32> to vector<16x128xf32>
    %9 = arith.addf %2, %8 : vector<16x128xf32>
    %c0_5 = arith.constant 0 : index
    %c0_6 = arith.constant 0 : index
    %10 = vector.load %arg4[%c0_5, %c0_6] : memref<16x128xf32, #tpu.memory_space<vmem>>, vector<16x128xf32>
    tpu.vector_store %arg4[%c0_5, %c0_6], %9 {strides = array<i32>} : memref<16x128xf32, #tpu.memory_space<vmem>>, vector<16x128xf32>,
    return
  }
  func.func @transform_0(%arg0: i32, %arg1: i32) -> (i32, i32) {
    %c0_i32 = arith.constant 0 : i32
    %c0_i32_0 = arith.constant 0 : i32
    return %arg0, %c0_i32 : i32, i32
  }
  func.func @transform_1(%arg0: i32, %arg1: i32) -> (i32, i32) {
    %c0_i32 = arith.constant 0 : i32
    %c0_i32_0 = arith.constant 0 : i32
    return %c0_i32, %arg1 : i32, i32
  }
  func.func @transform_2(%arg0: i32, %arg1: i32) -> (i32, i32) {
    %c0_i32 = arith.constant 0 : i32
    return %arg0, %arg1 : i32, i32
  }
}

</mosaic_0001>

<llo_original>
// kernel: tpu_custom_call.1
$region0: #{tpu_custom_call.1}
  #allocation0 [shape = 'u32[]', space=smem, size = 0x4, offset = 0x4, fixed_abs, tag = 'smem constant byte address 0x4 - core index']
  #allocation1 [shape = 'u32[144,128]{1,0:T(1,128)}', space=vmem, size = 0x12000, scoped, tag = 'internal scratch']
  %s0 = inlined_call_operand.hbm [shape: f32[16,64], index: 0, kind: input, shape index: {}]
  %s1 = inlined_call_operand.hbm [shape: f32[64,256], index: 1, kind: input, shape index: {}]
  %s2 = inlined_call_operand.hbm [shape: f32[16,256], index: 2, kind: output, shape index: {}]
  %s3 = sld [smem:[#allocation0]]
  $region49: #{tpu_custom_call.1} parent=0
    _
  %s5 = ssub.s32 1, %s3
  %s6 = scalar_select 0, %s5, %s3
  $region1: #{tpu_custom_call.1} parent=0
    #allocation2 [shape = 'u8[8192]{0}', space=vmem, size = 0x2000, scoped, tag = 'input window, operand 0, single buffered']
    #allocation3 [shape = 's32[2]{0}', space=sflag, size = 0x8, scoped, tag = 'scoped memory for tpu_custom_call.1']
    #allocation4 [shape = 's32[2]{0}', space=sflag, size = 0x8, scoped, tag = 'scoped memory for tpu_custom_call.1']
    #allocation5 [shape = 'u8[65536]{0}', space=vmem, size = 0x10000, scoped, tag = 'input window, operand 1']
    #allocation6 [shape = 's32[2]{0}', space=sflag, size = 0x8, scoped, tag = 'scoped memory for tpu_custom_call.1']
    #allocation7 [shape = 'u8[16384]{0}', space=vmem, size = 0x4000, scoped, tag = 'output window, operand 0']
    %7 = vsyncpa [#allocation3], 0
    %8 = vsyncpa [#allocation6], 0
    %s9 = scalar_lea.sflag [#allocation6], 1
    %10 = vsyncpa %s9, 0
    %11 = vsyncpa [#allocation4], 0
    %s12 = scalar_lea.sflag [#allocation4], 1
    %13 = vsyncpa %s12, 0
    loop: start=0, step=1, limit=4
    $region2: #{tpu_custom_call.1} parent=1 // loop_pre_header
      _
    $region3: #{tpu_custom_call.1} parent=1 // loop_header
      %s15 = sphi 0, %s19
      %p16 = scmp.ge.s32.totalorder %s15, 4
      %s22 = sphi 0, %s34
      %s23 = sphi 0, %s30
      %s24 = sphi 0, %s22
      %s25 = sphi 0, %s23
      %s26 = sphi 0, %s24
      %s27 = sphi 0, %s25
      %s37 = sphi 0, %s39
      %s40 = sphi 0, %s37
      %s41 = sphi 0, %s40
      %s57 = sphi 0, %s41
      %s63 = sphi 0, %s65
      %s66 = sphi 0, %s63
      %s67 = sphi 0, %s66
      %s83 = sphi 0, %s67
      %s91 = sphi 0, %s93
      %s94 = sphi 0, %s91
      %s95 = sphi 0, %s94
      %s111 = sphi 0, %s95
    $region4: #{tpu_custom_call.1} parent=1 // loop_header_branch
      %18 = sbr.rel (%p16) target = $region8
    $region5: #{tpu_custom_call.1} parent=1 // loop_body
      %s20 = ssub.s32 %s15, 1
      %s21 = ssub.s32 %s15, 2
      %s28 = sadd.s32 1, %s23
      %p29 = scmp.ge.s32.totalorder %s28, 2
      %s30 = scalar_select %p29, 0, %s28
      %s31 = sadd.s32 1, %s22
      %s32 = scalar_select %p29, %s31, %s22
      %p33 = scmp.ge.s32.totalorder %s32, 1
      %s34 = scalar_select %p33, 0, %s32
      %s35 = ssub.s32 %s22, %s34
      %p36 = scmp.eq.s32.totalorder %s35, 0
      %s38 = sadd.s32 %s37, 1
      %s39 = scalar_select %p36, %s37, %s38
      %p42 = pneg %p36
      %p43 = scmp.eq.s32.totalorder %s15, 1
      %p44 = por %p42, %p43
      %p45 = scmp.ne.s32.totalorder %s37, %s40
      %p46 = scmp.eq.s32.totalorder %s15, 0
      %p47 = por %p45, %p46
      %p48 = scmp.ne.s32.totalorder %s37, %s40
      %p49 = scmp.eq.s32.totalorder %s20, 1
      %p50 = por %p48, %p49
      %p51 = scmp.ne.s32.totalorder %s40, %s41
      %p52 = scmp.eq.s32.totalorder %s20, 0
      %p53 = por %p51, %p52
      %p54 = scmp.ne.s32.totalorder %s40, %s41
      %p55 = scmp.eq.s32.totalorder %s21, 1
      %p56 = por %p54, %p55
      %p58 = scmp.ne.s32.totalorder %s41, %s57
      %p59 = scmp.eq.s32.totalorder %s21, 0
      %p60 = por %p58, %p59
      %s61 = ssub.s32 %s23, %s30
      %p62 = scmp.eq.s32.totalorder %s61, 0
      %s64 = sadd.s32 %s63, 1
      %s65 = scalar_select %p62, %s63, %s64
      %p68 = pneg %p62
      %p69 = scmp.eq.s32.totalorder %s15, 1
      %p70 = por %p68, %p69
      %p71 = scmp.ne.s32.totalorder %s63, %s66
      %p72 = scmp.eq.s32.totalorder %s15, 0
      %p73 = por %p71, %p72
      %p74 = scmp.ne.s32.totalorder %s63, %s66
      %p75 = scmp.eq.s32.totalorder %s20, 1
      %p76 = por %p74, %p75
      %p77 = scmp.ne.s32.totalorder %s66, %s67
      %p78 = scmp.eq.s32.totalorder %s20, 0
      %p79 = por %p77, %p78
      %p80 = scmp.ne.s32.totalorder %s66, %s67
      %p81 = scmp.eq.s32.totalorder %s21, 1
      %p82 = por %p80, %p81
      %p84 = scmp.ne.s32.totalorder %s67, %s83
      %p85 = scmp.eq.s32.totalorder %s21, 0
      %p86 = por %p84, %p85
      %s87 = ssub.s32 %s22, %s34
      %s88 = ssub.s32 %s23, %s30
      %s89 = sor.u32 %s87, %s88
      %p90 = scmp.eq.s32.totalorder %s89, 0
      %s92 = sadd.s32 %s91, 1
      %s93 = scalar_select %p90, %s91, %s92
      %p96 = pneg %p90
      %p97 = scmp.eq.s32.totalorder %s15, 1
      %p98 = por %p96, %p97
      %p99 = scmp.ne.s32.totalorder %s91, %s94
      %p100 = scmp.eq.s32.totalorder %s15, 0
      %p101 = por %p99, %p100
      %p102 = scmp.ne.s32.totalorder %s91, %s94
      %p103 = scmp.eq.s32.totalorder %s20, 1
      %p104 = por %p102, %p103
      %p105 = scmp.ne.s32.totalorder %s94, %s95
      %p106 = scmp.eq.s32.totalorder %s20, 0
      %p107 = por %p105, %p106
      %p108 = scmp.ne.s32.totalorder %s94, %s95
      %p109 = scmp.eq.s32.totalorder %s21, 1
      %p110 = por %p108, %p109
      %p112 = scmp.ne.s32.totalorder %s95, %s111
      %p113 = scmp.eq.s32.totalorder %s21, 0
      %p114 = por %p112, %p113
      %p115 = scmp.le.s32.totalorder 1, %s15
      %p116 = scmp.lt.s32.totalorder %s15, 3
      %p117 = pnand %p115, %p116
      %p118 = pneg %p117
      // Predicated region
      $region9: #{tpu_custom_call.1} parent=5 // pred_check
        _
      $region10: #{tpu_custom_call.1} parent=5 // pred_check_branch
        %120 = sbr.rel (%p117) target = $region12
      $region11: #{tpu_custom_call.1} parent=5 // pred_region
        %s121 = ssub.s32 %s15, 1
        // Predicated region
        $region13: #{tpu_custom_call.1} parent=11 // pred_check
          %p122 = pneg %p53
        $region14: #{tpu_custom_call.1} parent=11 // pred_check_branch
          %124 = sbr.rel (%p122) target = $region16
        $region15: #{tpu_custom_call.1} parent=11 // pred_region
          %s125 = smul.u32 2, %s24
          %s127 = ssub.s32 256, 256
          %128 = vsyncadd [#allocation3], %s127
          %s129 = smul.addr %s125, 128
          %s130 = scalar_lea.hbm %s0, %s129
          %s131 = sshll.u32 [#allocation2], 4
          %s132 = int_to_ptr.vmem [resolvable:$true] %s131
          %137 = dma.hbm_to_vmem [thread:$0]  %s130, 256, %s132, [#allocation3], 128, 128, 8
        $region16: #{tpu_custom_call.1} parent=11 // pred_fallthru
          _
      $region12: #{tpu_custom_call.1} parent=5 // pred_fallthru
        _
      %p138 = scmp.lt.s32.totalorder %s15, 2
      // Predicated region
      $region17: #{tpu_custom_call.1} parent=5 // pred_check
        %p139 = pneg %p138
      $region18: #{tpu_custom_call.1} parent=5 // pred_check_branch
        %141 = sbr.rel (%p139) target = $region20
      $region19: #{tpu_custom_call.1} parent=5 // pred_region
        // Predicated region
        $region21: #{tpu_custom_call.1} parent=19 // pred_check
          %p142 = pneg %p73
        $region22: #{tpu_custom_call.1} parent=19 // pred_check_branch
          %144 = sbr.rel (%p142) target = $region24
        $region23: #{tpu_custom_call.1} parent=19 // pred_region
          %s145 = sand.u32 %s63, 1
          %s146 = scalar_lea.sflag [#allocation6], %s145
          %s147 = sand.u32 %s63, 1
          %s148 = smul.addr %s147, 64
          %s149 = scalar_lea.vmem [#allocation5], %s148
          %s151 = ssub.s32 1024, 1024
          %152 = vsyncadd %s146, %s151
          %s153 = smul.addr %s23, 128
          %s154 = scalar_lea.hbm %s1, %s153
          %s155 = sshll.u32 %s149, 4
          %s156 = int_to_ptr.vmem [resolvable:$true] %s155
          %161 = dma.hbm_to_vmem [thread:$0]  %s154, 1024, %s156, %s146, 256, 128, 8
        $region24: #{tpu_custom_call.1} parent=19 // pred_fallthru
          _
      $region20: #{tpu_custom_call.1} parent=5 // pred_fallthru
        _
      %p162 = scmp.le.s32.totalorder 1, %s15
      %p163 = scmp.lt.s32.totalorder %s15, 3
      %p164 = pnand %p162, %p163
      %p165 = pneg %p164
      // Predicated region
      $region25: #{tpu_custom_call.1} parent=5 // pred_check
        _
      $region26: #{tpu_custom_call.1} parent=5 // pred_check_branch
        %167 = sbr.rel (%p164) target = $region28
      $region27: #{tpu_custom_call.1} parent=5 // pred_region
        %s168 = ssub.s32 %s15, 1
        // Predicated region
        $region29: #{tpu_custom_call.1} parent=27 // pred_check
          %p169 = pneg %p53
        $region30: #{tpu_custom_call.1} parent=27 // pred_check_branch
          %171 = sbr.rel (%p169) target = $region32
        $region31: #{tpu_custom_call.1} parent=27 // pred_region
          %172 = dma.done [#allocation3], 256
        $region32: #{tpu_custom_call.1} parent=27 // pred_fallthru
          _
        %s173 = sand.u32 %s66, 1
        %s174 = scalar_lea.sflag [#allocation6], %s173
        %s175 = sand.u32 %s66, 1
        %s176 = smul.addr %s175, 64
        %s177 = scalar_lea.vmem [#allocation5], %s176
        // Predicated region
        $region33: #{tpu_custom_call.1} parent=27 // pred_check
          %p178 = pneg %p79
        $region34: #{tpu_custom_call.1} parent=27 // pred_check_branch
          %180 = sbr.rel (%p178) target = $region36
        $region35: #{tpu_custom_call.1} parent=27 // pred_region
          %181 = dma.done %s174, 1024
        $region36: #{tpu_custom_call.1} parent=27 // pred_fallthru
          _
        %p182 = pneg %p53
        %p183 = pneg %p50
        %s184 = sand.u32 %s66, 1
        %s185 = scalar_lea.sflag [#allocation6], %s184
        %s186 = sand.u32 %s66, 1
        %s187 = smul.addr %s186, 64
        %s188 = scalar_lea.vmem [#allocation5], %s187
        %p189 = pneg %p79
        %p190 = pneg %p76
        %p191 = pneg %p107
        %p192 = pneg %p104
        %s193 = sand.u32 %s94, 1
        %s194 = scalar_lea.sflag [#allocation4], %s193
        %s195 = sand.u32 %s94, 1
        %s196 = smul.addr %s195, 16
        %s197 = scalar_lea.vmem [#allocation7], %s196
        %s198 = smul.u32 2, %s24
        %s199 = smul.u32 2, %s24
        %v200 = vld [vmem:[%s177] sm:$0xff]
        %v201 = vld [vmem:[%s177 + $0x8] sm:$0xff]
        %v202 = vld [vmem:[%s177 + $0x10] sm:$0xff]
        %v203 = vld [vmem:[%s177 + $0x18] sm:$0xff]
        %v204 = vld [vmem:[%s177 + $0x20] sm:$0xff]
        %v205 = vld [vmem:[%s177 + $0x28] sm:$0xff]
        %v206 = vld [vmem:[%s177 + $0x30] sm:$0xff]
        %v207 = vld [vmem:[%s177 + $0x38] sm:$0xff]
        %v208 = vld [vmem:[#allocation2] sm:$0xff]
        %v209 = vld [vmem:[#allocation2 + $0x8] sm:$0xff]
        %v210 = vmul.f32 %v200, %v200
        %v211 = vmul.f32 %v201, %v201
        %v212 = vmul.f32 %v202, %v202
        %v213 = vmul.f32 %v203, %v203
        %v214 = vmul.f32 %v204, %v204
        %v215 = vmul.f32 %v205, %v205
        %v216 = vmul.f32 %v206, %v206
        %v217 = vmul.f32 %v207, %v207
        %v218 = vadd.f32 %v210, %v211
        %v219 = vadd.f32 %v218, %v212
        %v220 = vadd.f32 %v219, %v213
        %v221 = vadd.f32 %v220, %v214
        %v222 = vadd.f32 %v221, %v215
        %v223 = vadd.f32 %v222, %v216
        %v224 = vadd.f32 %v223, %v217
        %v225 = vrot.slane %v224, 4
        %v226 = vadd.f32 %v224, %v225
        %v227 = vrot.slane %v226, 2
        %v228 = vadd.f32 %v226, %v227
        %v229 = vrot.slane %v228, 1
        %v230 = vadd.f32 %v228, %v229
        %v231 = vmul.f32 %v230, -0.5
        %vm232 = vcmask 523264
        %v234 = vsel %vm232, %v208, 0
        %v237 = vsel %vm232, %v209, 0
        %239 = vmatprep.subr.mxu0 0.0
        %240 = vmatpush1.msra.mxu0 0.0
        %241 = vmatprep.subr.mxu0 0.0
        %242 = vmatpush1.msra.mxu0 0.0
        %243 = vmatprep.subr.mxu0 0.0
        %244 = vmatpush1.msra.mxu0 0.0
        %245 = vmatprep.subr.mxu0 0.0
        %246 = vmatpush1.msra.mxu0 0.0
        %247 = vmatprep.subr.mxu0 0.0
        %248 = vmatpush1.msra.mxu0 0.0
        %249 = vmatprep.subr.mxu0 0.0
        %250 = vmatpush1.msra.mxu0 0.0
        %251 = vmatprep.subr.mxu0 0.0
        %252 = vmatpush1.msra.mxu0 0.0
        %253 = vmatprep.subr.mxu0 0.0
        %254 = vmatpush1.msra.mxu0 0.0
        %255 = vmatprep.subr.mxu0 0.0
        %256 = vmatpush1.msra.mxu0 %v207
        %257 = vmatprep.subr.mxu0 0.0
        %258 = vmatpush1.msra.mxu0 %v206
        %259 = vmatprep.subr.mxu0 0.0
        %260 = vmatpush1.msra.mxu0 %v205
        %261 = vmatprep.subr.mxu0 0.0
        %262 = vmatpush1.msra.mxu0 %v204
        %263 = vmatprep.subr.mxu0 0.0
        %264 = vmatpush1.msra.mxu0 %v203
        %265 = vmatprep.subr.mxu0 0.0
        %266 = vmatpush1.msra.mxu0 %v202
        %267 = vmatprep.subr.mxu0 0.0
        %268 = vmatpush1.msra.mxu0 %v201
        %269 = vmatprep.subr.mxu0 0.0
        %270 = vmatpush1.msra.mxu0 %v200
        %271 = vmatprep.subr.mxu0 0.0
        %272 = vmatpush2.msra.mxu0 0.0
        %273 = vmatprep.subr.mxu0 0.0
        %274 = vmatpush2.msra.mxu0 0.0
        %275 = vmatprep.subr.mxu0 0.0
        %276 = vmatpush2.msra.mxu0 0.0
        %277 = vmatprep.subr.mxu0 0.0
        %278 = vmatpush2.msra.mxu0 0.0
        %279 = vmatprep.subr.mxu0 0.0
        %280 = vmatpush2.msra.mxu0 0.0
        %281 = vmatprep.subr.mxu0 0.0
        %282 = vmatpush2.msra.mxu0 0.0
        %283 = vmatprep.subr.mxu0 0.0
        %284 = vmatpush2.msra.mxu0 0.0
        %285 = vmatprep.subr.mxu0 0.0
        %286 = vmatpush2.msra.mxu0 0.0
        %287 = vmatprep.subr.mxu0 0.0
        %288 = vmatpush2.msra.mxu0 0.0
        %289 = vmatprep.subr.mxu0 0.0
        %290 = vmatpush2.msra.mxu0 0.0
        %291 = vmatprep.subr.mxu0 0.0
        %292 = vmatpush2.msra.mxu0 0.0
        %293 = vmatprep.subr.mxu0 0.0
        %294 = vmatpush2.msra.mxu0 0.0
        %295 = vmatprep.subr.mxu0 0.0
        %296 = vmatpush2.msra.mxu0 0.0
        %297 = vmatprep.subr.mxu0 0.0
        %298 = vmatpush2.msra.mxu0 0.0
        %299 = vmatprep.subr.mxu0 0.0
        %300 = vmatpush2.msra.mxu0 0.0
        %301 = vmatprep.subr.mxu0 0.0
        %302 = vmatpush2.msra.mxu0 0.0
        %303 = vmatprep.mubr.f32.mxu0 0.0
        %304 = vmatmul.mubr.f32.gmra.mxu0 %v234
        %v305 = vpop.f32.mrf.mxu0
        %v306 = vadd.f32 %v231, %v305
        %v307 = vpop.f32.mrf.mxu0
        %308 = vmatprep.mubr.f32.mxu0 0.0
        %309 = vmatmul.mubr.f32.gmra.mxu0 %v237
        %v310 = vpop.f32.mrf.mxu0
        %v311 = vadd.f32 %v231, %v310
        %v312 = vpop.f32.mrf.mxu0
        %313 = vdwg.mxu0
        %314 = vst [vmem:[%s197] sm:$0xff] %v306
        %315 = vst [vmem:[%s197 + $0x8] sm:$0xff] %v311
        %s316 = sand.u32 %s94, 1
        %s317 = scalar_lea.sflag [#allocation4], %s316
        %s318 = sand.u32 %s94, 1
        %s319 = smul.addr %s318, 16
        %s320 = scalar_lea.vmem [#allocation7], %s319
        // Predicated region
        $region37: #{tpu_custom_call.1} parent=27 // pred_check
          %p321 = pneg %p104
        $region38: #{tpu_custom_call.1} parent=27 // pred_check_branch
          %323 = sbr.rel (%p321) target = $region40
        $region39: #{tpu_custom_call.1} parent=27 // pred_region
          %s324 = smul.u32 2, %s24
          %s326 = ssub.s32 256, 256
          %327 = vsyncadd %s317, %s326
          %s328 = smul.addr %s324, 2
          %s329 = sadd.s32 %s25, %s328
          %s330 = smul.addr %s329, 128
          %s331 = scalar_lea.hbm %s2, %s330
          %s332 = sshll.u32 %s320, 4
          %s333 = int_to_ptr.vmem [resolvable:$true] %s332
          %338 = dma.vmem_to_hbm [thread:$0]  %s333, 256, %s331, %s317, 128, 256, 8
        $region40: #{tpu_custom_call.1} parent=27 // pred_fallthru
          _
      $region28: #{tpu_custom_call.1} parent=5 // pred_fallthru
        _
      %p339 = scmp.le.s32.totalorder 2, %s15
      // Predicated region
      $region41: #{tpu_custom_call.1} parent=5 // pred_check
        %p340 = pneg %p339
      $region42: #{tpu_custom_call.1} parent=5 // pred_check_branch
        %342 = sbr.rel (%p340) target = $region44
      $region43: #{tpu_custom_call.1} parent=5 // pred_region
        %s343 = ssub.s32 %s15, 2
        // Predicated region
        $region45: #{tpu_custom_call.1} parent=43 // pred_check
          %p344 = pneg %p110
        $region46: #{tpu_custom_call.1} parent=43 // pred_check_branch
          %346 = sbr.rel (%p344) target = $region48
        $region47: #{tpu_custom_call.1} parent=43 // pred_region
          %s347 = sand.u32 %s95, 1
          %s348 = scalar_lea.sflag [#allocation4], %s347
          %s349 = sand.u32 %s95, 1
          %s350 = smul.addr %s349, 16
          %s351 = scalar_lea.vmem [#allocation7], %s350
          %352 = dma.done %s348, 256
        $region48: #{tpu_custom_call.1} parent=43 // pred_fallthru
          _
      $region44: #{tpu_custom_call.1} parent=5 // pred_fallthru
        _
    $region6: #{tpu_custom_call.1} parent=1 // loop_footer
      %s19 = sadd.s32 1, %s15
    $region7: #{tpu_custom_call.1} parent=1 // loop_footer_branch
      %14 = sbr.rel target = $region3
    $region8: #{tpu_custom_call.1} parent=1 // loop_exit
      _
    %353 = vsyncpa [#allocation3], 1
    %s354 = scalar_lea.sflag [#allocation3], 1
    %355 = vsyncpa %s354, 1
    %356 = vsyncpa [#allocation6], 1
    %s357 = scalar_lea.sflag [#allocation6], 1
    %358 = vsyncpa %s357, 1
    %359 = vsyncpa [#allocation4], 1
    %s360 = scalar_lea.sflag [#allocation4], 1
    %361 = vsyncpa %s360, 1

</llo_original>
